<compile_context>
chip_gen: v6e
topology: v6e:2x2x1
jax: 0.10.0
libtpu: 0.0.40
codegen_flags: <defaults>
</compile_context>

<pallas_src>
import functools
import math

import jax
import jax.numpy as jnp
from jax.experimental import pallas as pl
from jax.experimental.pallas import tpu as pltpu


# ----------------------------------------------------------------------------
# Deterministic basis construction (reimplementation of build_window /
# build_optimal_window / build_Fourier_basis used by the PyTorch module).
# ----------------------------------------------------------------------------
def build_window(kernel_size, window_fn="hann"):
    n = jnp.arange(kernel_size, dtype=jnp.float32)
    if window_fn == "hann":
        # periodic hann window (torch.hann_window default)
        return 0.5 - 0.5 * jnp.cos(2.0 * jnp.pi * n / kernel_size)
    raise ValueError(f"unsupported window_fn {window_fn}")


def build_optimal_window(window, hop_size):
    kernel_size = window.shape[0]
    n_shift = kernel_size // hop_size
    rolled = jnp.stack(
        [jnp.roll(window, hop_size * idx) for idx in range(n_shift)], axis=0)
    norm = jnp.sum(rolled**2, axis=0)
    return window / norm


def build_fourier_basis(kernel_size, normalize=True):
    k = jnp.arange(kernel_size, dtype=jnp.float32)[:, None]
    n = jnp.arange(kernel_size, dtype=jnp.float32)[None, :]
    ang = 2.0 * jnp.pi * k * n / kernel_size
    cos_basis = jnp.cos(ang)
    sin_basis = jnp.sin(ang)
    if normalize:
        scale = 1.0 / math.sqrt(kernel_size)
        cos_basis = cos_basis * scale
        sin_basis = sin_basis * scale
    return cos_basis, sin_basis


def make_fourier_decoder_basis(in_channels, out_channels, kernel_size, stride,
                               window_fn="hann"):
    assert out_channels == 1
    assert in_channels % (kernel_size * 2) == 0
    repeat = in_channels // (kernel_size * 2)

    window = build_window(kernel_size, window_fn=window_fn)
    optimal_window = build_optimal_window(window, hop_size=stride)
    cos_basis, sin_basis = build_fourier_basis(kernel_size, normalize=True)
    cos_basis = cos_basis * optimal_window / repeat
    sin_basis = -sin_basis * optimal_window / repeat

    pieces = []
    for idx in range(repeat):
        shift = (kernel_size // repeat) * idx
        pieces.append(jnp.roll(cos_basis, shift, axis=1))
        pieces.append(jnp.roll(sin_basis, shift, axis=1))
    basis = jnp.concatenate(pieces, axis=0)            # (in_channels, K)
    return basis[:, None, :].astype(jnp.float32)       # (in_channels, 1, K)


def _round_up(v, m):
    return ((v + m - 1) // m) * m


def pack_fourier_decoder_weight(basis, stride):
    """Hop-aligned, bf16 weight matrix consumed by the kernel.

    Column group m (128-lane aligned, width round_up(stride,128)) holds the
    kernel taps [m*stride, (m+1)*stride) zero-padded to the group width.
    Computed ONCE outside the jitted per-call path.
    """
    C_in, _, K = basis.shape
    s = int(stride)
    R = -(-K // s)
    grp = _round_up(s, 128)
    W = basis[:, 0, :].astype(jnp.float32)
    cols = []
    for m in range(R):
        lo, hi = m * s, min(K, (m + 1) * s)
        cols.append(jnp.pad(W[:, lo:hi], ((0, 0), (0, grp - (hi - lo)))))
    return jnp.concatenate(cols, axis=1).astype(jnp.bfloat16)   # (C_in, R*grp)


# ----------------------------------------------------------------------------
# VMEM budgeting helpers (generation aware).
# ----------------------------------------------------------------------------
def _vmem_capacity_bytes():
    try:
        return int(pltpu.get_tpu_info().vmem_capacity_bytes)
    except Exception:
        return 64 * 2**20          # assume the smallest (v7x per-TensorCore)


def _vmem_bytes_estimate(tT, C_in, Kc, s, R1pad):
    s_lane = _round_up(s, 128)
    rows = _round_up(tT, 8)
    x_blk = 2 * rows * _round_up(C_in, 128) * 2     # double-buffered bf16 x tile
    w_blk = _round_up(C_in, 8) * Kc * 2             # single-buffered bf16 weight
    o_blk = 2 * rows * s_lane * 4                   # double-buffered f32 out tile
    t_blk = 2 * R1pad * s_lane * 4                  # tail output block
    halo = R1pad * s_lane * 4                       # halo scratch
    frames = rows * Kc * 4                          # matmul result temporary
    return x_blk + w_blk + o_blk + t_blk + halo + frames


def _pick_frame_tile(T, C_in, Kc, s, R1pad, budget):
    # Whole sequence as a single tile only when it comfortably fits.
    if _vmem_bytes_estimate(T, C_in, Kc, s, R1pad) <= budget:
        return T
    for cand in (1024, 896, 768, 640, 512, 384, 256, 128):
        if cand < T and _vmem_bytes_estimate(cand, C_in, Kc, s, R1pad) <= budget:
            return cand
    return 128


def _const_weight_spec(shape, index_map):
    # Single-buffer the never-changing weight block; fall back gracefully if
    # pipeline_mode / pl.Buffered is unavailable in the installed jax.
    try:
        return pl.BlockSpec(shape, index_map, pipeline_mode=pl.Buffered(1))
    except (TypeError, AttributeError):
        return pl.BlockSpec(shape, index_map)


# ----------------------------------------------------------------------------
# Pallas kernel: per (batch, frame-tile)
#   frames = x_tile @ W_dense     (tT, C_in) x (C_in, R*grp), bf16 in / f32 acc
#   overlap-add the R hops into the tT body rows; carry the R-1 spill rows to
#   the next frame tile via a small VMEM scratch (sequential t axis).
# ----------------------------------------------------------------------------
def _decoder_kernel(x_ref, w_ref, o_ref, tail_ref, halo_ref, *,
                    R, s, grp, tT, R1pad, add_halo):
    t = pl.program_id(1)

    # MXU-native layout: contract the LAST dim of the LHS (no XLU transpose).
    frames = jnp.dot(x_ref[...], w_ref[...],
                     preferred_element_type=jnp.float32)      # (tT, R*grp) f32

    # Overlap-add of the R hops into the body rows of this tile:
    #   body[r] = sum_{m <= r} frames[r - m, hop-m columns]
    o_ref[...] = frames[:, 0:s]
    for m in range(1, R):
        rows = tT - m
        if rows > 0:
            o_ref[pl.ds(m, rows), :] = (
                o_ref[pl.ds(m, rows), :]
                + frames[0:rows, m * grp:m * grp + s])

    # Fold in the halo carried from the previous frame tile (rows its hops
    # spilled past its body).  Aligned 8-row window; halo_ref is read here and
    # only overwritten afterwards (program order on the ref).
    if add_halo:
        @pl.when(t > 0)
        def _():
            o_ref[pl.ds(0, R1pad), :] = (o_ref[pl.ds(0, R1pad), :]
                                         + halo_ref[...])

    # New spill rows [tT, tT + R - 1):  spill[j] = sum_{m > j} frames[tT-m+j, hop m]
    halo_ref[...] = jnp.zeros_like(halo_ref)
    for m in range(1, R):
        j0 = max(0, m - tT)
        rows = m - j0
        if rows > 0:
            halo_ref[pl.ds(j0, rows), :] = (
                halo_ref[pl.ds(j0, rows), :]
                + frames[tT - m + j0:tT, m * grp:m * grp + s])

    # The last tile's spill is the tail of the full signal.
    @pl.when(t == pl.num_programs(1) - 1)
    def _():
        tail_ref[...] = halo_ref[...]


@functools.partial(jax.jit, static_argnames=("kernel_size", "stride", "frame_tile"))
def fourier_decoder(x, w_dense, *, kernel_size, stride, frame_tile=None):
    """conv_transpose1d(x, basis, stride) with the hop-regrouped basis w_dense.

    x: (B, C_in, T) float32/bfloat16 ;  w_dense = pack_fourier_decoder_weight(basis)
    -> (B, 1, (T-1)*stride + kernel_size) float32.
    """
    B, C_in, T = x.shape
    K = int(kernel_size)
    s = int(stride)
    R = -(-K // s)                       # ceil(K / s): number of overlapping hops
    grp = _round_up(s, 128)              # 128-lane aligned column group per hop
    Kc = R * grp
    assert w_dense.shape == (C_in, Kc), (w_dense.shape, (C_in, Kc))
    L = (T - 1) * s + K
    R1pad = max(8, _round_up(R - 1, 8))  # 8-aligned halo / tail row count

    capacity = _vmem_capacity_bytes()
    budget = int(0.40 * capacity)

    # --- frame-axis tile selection (bounds VMEM, keeps the pipeline fed).
    if frame_tile is None:
        tT = _pick_frame_tile(T, C_in, Kc, s, R1pad, budget)
    else:
        tT = _round_up(max(int(frame_tile), 128), 128)
    if tT >= T:
        tT = T                                      # single tile, full block
    else:
        tT = max(tT, _round_up(R1pad, 128))         # halo must fit in one tile
        if tT >= T:
            tT = T
    nT = -(-T // tT)
    T_pad = nT * tT
    add_halo = nT > 1
    assert (not add_halo) or R1pad <= tT

    # --- one fused wrapper pass over x: NCT -> NTC swap + bf16 cast
    #     (zero-pad the frame axis only when the tile does not divide T).
    x_t = jnp.swapaxes(x, 1, 2).astype(jnp.bfloat16)            # (B, T, C_in)
    if T_pad != T:
        x_t = jnp.pad(x_t, ((0, 0), (0, T_pad - T), (0, 0)))

    vmem_est = _vmem_bytes_estimate(tT, C_in, Kc, s, R1pad)
    vmem_limit = int(max(32 * 2**20, min(int(0.85 * capacity), 2 * vmem_est)))

    cost = pl.CostEstimate(
        flops=2 * B * T_pad * C_in * Kc,
        transcendentals=0,
        bytes_accessed=(B * T_pad * C_in * 2 + C_in * Kc * 2
                        + B * (T_pad + R1pad) * s * 4))

    kernel = functools.partial(_decoder_kernel, R=R, s=s, grp=grp, tT=tT,
                               R1pad=R1pad, add_halo=add_halo)
    main, tail = pl.pallas_call(
        kernel,
        out_shape=(jax.ShapeDtypeStruct((B, T_pad, s), jnp.float32),
                   jax.ShapeDtypeStruct((B, R1pad, s), jnp.float32)),
        grid_spec=pltpu.PrefetchScalarGridSpec(
            num_scalar_prefetch=0,
            grid=(B, nT),
            in_specs=[
                pl.BlockSpec((None, tT, C_in), lambda b, t: (b, t, 0)),
                _const_weight_spec((C_in, Kc), lambda b, t: (0, 0)),
            ],
            out_specs=[
                pl.BlockSpec((None, tT, s), lambda b, t: (b, t, 0)),
                pl.BlockSpec((None, R1pad, s), lambda b, t: (b, 0, 0)),
            ],
            scratch_shapes=[pltpu.VMEM((R1pad, s), jnp.float32)],
        ),
        compiler_params=pltpu.CompilerParams(
            dimension_semantics=("parallel", "arbitrary"),
            vmem_limit_bytes=vmem_limit),
        cost_estimate=cost,
    )(x_t, w_dense)

    # --- row-major flatten of (row, within-hop) == 1-D time axis;
    #     append the tail rows (spill past the last frame); trim padding.
    y = main.reshape(B, T_pad * s)
    if R > 1:
        y = jnp.concatenate(
            [y, tail[:, :R - 1, :].reshape(B, (R - 1) * s)], axis=1)
    return y[:, None, :L]


# ----------------------------------------------------------------------------
# Pure-JAX reference (conv_transpose1d semantics) for verification
# ----------------------------------------------------------------------------
def ref_conv_transpose1d(x, w, stride):
    B, C_in, T = x.shape
    _, C_out, K = w.shape
    L = (T - 1) * stride + K
    frames = jnp.einsum("bci,cok->boik", x, w)            # (B, C_out, T, K)
    pos = (jnp.arange(T)[:, None] * stride
           + jnp.arange(K)[None, :]).reshape(-1)          # (T*K,)
    out = jnp.zeros((B, C_out, L), jnp.float32)
    out = out.at[:, :, pos].add(frames.reshape(B, C_out, T * K))
    return out


if __name__ == "__main__":
    # Module-consistent small shapes.
    kernel_size, stride, repeat = 8, 4, 2
    in_channels = repeat * kernel_size * 2        # 32 (satisfies C_in % 2K == 0)
    out_channels = 1

    basis = make_fourier_decoder_basis(in_channels, out_channels,
                                       kernel_size, stride, window_fn="hann")
    w_dense = pack_fourier_decoder_weight(basis, stride)        # hoisted out of jit
    basis_q = basis.astype(jnp.bfloat16).astype(jnp.float32)    # what the MXU sees

    key = jax.random.PRNGKey(0)

    # --- Config 1: tiny (single frame tile), B=2, T=8.
    B, T = 2, 8
    x = jax.random.normal(key, (B, in_channels, T), dtype=jnp.float32)
    y = jax.block_until_ready(
        fourier_decoder(x, w_dense, kernel_size=kernel_size, stride=stride))
    y_ref = ref_conv_transpose1d(x.astype(jnp.bfloat16).astype(jnp.float32),
                                 basis_q, stride)
    assert y.shape == (B, 1, (T - 1) * stride + kernel_size), y.shape
    assert jnp.allclose(y, y_ref, atol=1e-3, rtol=1e-3), (
        float(jnp.max(jnp.abs(y - y_ref))))

    # --- Config 2: exercises the tiled-T / in-kernel halo-carry path (grid (1, 2)).
    B2, T2 = 1, 256
    x2 = jax.random.normal(jax.random.PRNGKey(1), (B2, in_channels, T2),
                           dtype=jnp.float32)
    y2 = jax.block_until_ready(
        fourier_decoder(x2, w_dense, kernel_size=kernel_size, stride=stride,
                        frame_tile=128))
    y2_ref = ref_conv_transpose1d(x2.astype(jnp.bfloat16).astype(jnp.float32),
                                  basis_q, stride)
    assert y2.shape == (B2, 1, (T2 - 1) * stride + kernel_size), y2.shape
    assert jnp.allclose(y2, y2_ref, atol=1e-3, rtol=1e-3), (
        float(jnp.max(jnp.abs(y2 - y2_ref))))

    print("KERNEL_OK")
</pallas_src>

<mosaic_0001>
module attributes {stable_mosaic.version = 11 : i64} {
  func.func @_decoder_kernel(%arg0: i32, %arg1: i32, %arg2: memref<1x8x32xbf16, #tpu.memory_space<vmem>>, %arg3: memref<32x256xbf16, #tpu.memory_space<vmem>>, %arg4: memref<1x8x4xf32, #tpu.memory_space<vmem>>, %arg5: memref<1x8x4xf32, #tpu.memory_space<vmem>>, %arg6: memref<8x4xf32, #tpu.memory_space<vmem>>) attributes {dimension_semantics = [#tpu.dimension_semantics<parallel>, #tpu.dimension_semantics<arbitrary>], iteration_bounds = array<i64: 2, 1>, scalar_prefetch = 0 : i64, scratch_operands = 1 : i64, tpu.core_type = #tpu.core_type<tc>, window_params = [{transform_indices = @transform_0, window_bounds = array<i64: 1, 8, 32>}, {pipeline_mode = #tpu.pipeline_mode<synchronous>, transform_indices = @transform_1, window_bounds = array<i64: 32, 256>}, {transform_indices = @transform_2, window_bounds = array<i64: 1, 8, 4>}, {transform_indices = @transform_3, window_bounds = array<i64: 1, 8, 4>}]} {
    %c0 = arith.constant 0 : index
    %c0_0 = arith.constant 0 : index
    %c0_1 = arith.constant 0 : index
    %0 = vector.load %arg2[%c0, %c0_0, %c0_1] : memref<1x8x32xbf16, #tpu.memory_space<vmem>>, vector<1x8x32xbf16>
    %1 = vector.shape_cast %0 : vector<1x8x32xbf16> to vector<8x32xbf16>
    %c0_2 = arith.constant 0 : index
    %c0_3 = arith.constant 0 : index
    %2 = vector.load %arg3[%c0_2, %c0_3] : memref<32x256xbf16, #tpu.memory_space<vmem>>, vector<32x256xbf16>
    %cst = arith.constant dense<0.000000e+00> : vector<8x256xf32>
    %3 = tpu.matmul %1, %2, %cst {dimension_numbers = #tpu.dot_dimension_numbers<[1], [0], [0], [1], [0, 0, 1, 1], [], []>} : vector<8x32xbf16>, vector<32x256xbf16>, vector<8x256xf32> -> vector<8x256xf32>
    %4 = vector.extract_strided_slice %3 {offsets = [0, 0], sizes = [8, 4], strides = [1, 1]} : vector<8x256xf32> to vector<8x4xf32>
    %c0_4 = arith.constant 0 : index
    %c0_5 = arith.constant 0 : index
    %c0_6 = arith.constant 0 : index
    %5 = vector.load %arg4[%c0_4, %c0_5, %c0_6] : memref<1x8x4xf32, #tpu.memory_space<vmem>>, vector<1x8x4xf32>
    %6 = vector.shape_cast %5 : vector<1x8x4xf32> to vector<8x4xf32>
    %7 = vector.shape_cast %4 : vector<8x4xf32> to vector<1x8x4xf32>
    tpu.vector_store %arg4[%c0_4, %c0_5, %c0_6], %7 {strides = array<i32>} : memref<1x8x4xf32, #tpu.memory_space<vmem>>, vector<1x8x4xf32>,
    %c0_7 = arith.constant 0 : index
    %c1 = arith.constant 1 : index
    %c0_8 = arith.constant 0 : index
    %8 = vector.load %arg4[%c0_7, %c1, %c0_8] : memref<1x8x4xf32, #tpu.memory_space<vmem>>, vector<1x7x4xf32>
    %9 = vector.shape_cast %8 : vector<1x7x4xf32> to vector<7x4xf32>
    %10 = vector.extract_strided_slice %3 {offsets = [0, 128], sizes = [7, 4], strides = [1, 1]} : vector<8x256xf32> to vector<7x4xf32>
    %11 = arith.addf %9, %10 : vector<7x4xf32>
    %c0_9 = arith.constant 0 : index
    %c1_10 = arith.constant 1 : index
    %c0_11 = arith.constant 0 : index
    %12 = vector.load %arg4[%c0_9, %c1_10, %c0_11] : memref<1x8x4xf32, #tpu.memory_space<vmem>>, vector<1x7x4xf32>
    %13 = vector.shape_cast %12 : vector<1x7x4xf32> to vector<7x4xf32>
    %14 = vector.shape_cast %11 : vector<7x4xf32> to vector<1x7x4xf32>
    tpu.vector_store %arg4[%c0_9, %c1_10, %c0_11], %14 {strides = array<i32>} : memref<1x8x4xf32, #tpu.memory_space<vmem>>, vector<1x7x4xf32>,
    %cst_12 = arith.constant 0.000000e+00 : f32
    %15 = vector.broadcast %cst_12 : f32 to vector<8x4xf32>
    %c0_13 = arith.constant 0 : index
    %c0_14 = arith.constant 0 : index
    %16 = vector.load %arg6[%c0_13, %c0_14] : memref<8x4xf32, #tpu.memory_space<vmem>>, vector<8x4xf32>
    tpu.vector_store %arg6[%c0_13, %c0_14], %15 {strides = array<i32>} : memref<8x4xf32, #tpu.memory_space<vmem>>, vector<8x4xf32>,
    %c0_15 = arith.constant 0 : index
    %c0_16 = arith.constant 0 : index
    %17 = vector.load %arg6[%c0_15, %c0_16] : memref<8x4xf32, #tpu.memory_space<vmem>>, vector<1x4xf32>
    %18 = vector.extract_strided_slice %3 {offsets = [7, 128], sizes = [1, 4], strides = [1, 1]} : vector<8x256xf32> to vector<1x4xf32>
    %19 = arith.addf %17, %18 : vector<1x4xf32>
    %c0_17 = arith.constant 0 : index
    %c0_18 = arith.constant 0 : index
    %20 = vector.load %arg6[%c0_17, %c0_18] : memref<8x4xf32, #tpu.memory_space<vmem>>, vector<1x4xf32>
    tpu.vector_store %arg6[%c0_17, %c0_18], %19 {strides = array<i32>} : memref<8x4xf32, #tpu.memory_space<vmem>>, vector<1x4xf32>,
    %c0_i32 = arith.constant 0 : i32
    %21 = arith.cmpi eq, %arg1, %c0_i32 : i32
    %22 = arith.extui %21 : i1 to i32
    %c0_i32_19 = arith.constant 0 : i32
    %23 = arith.cmpi ne, %22, %c0_i32_19 : i32
    scf.if %23 {
      %c0_20 = arith.constant 0 : index
      %c0_21 = arith.constant 0 : index
      %24 = vector.load %arg6[%c0_20, %c0_21] : memref<8x4xf32, #tpu.memory_space<vmem>>, vector<8x4xf32>
      %c0_22 = arith.constant 0 : index
      %c0_23 = arith.constant 0 : index
      %c0_24 = arith.constant 0 : index
      %25 = vector.load %arg5[%c0_22, %c0_23, %c0_24] : memref<1x8x4xf32, #tpu.memory_space<vmem>>, vector<1x8x4xf32>
      %26 = vector.shape_cast %25 : vector<1x8x4xf32> to vector<8x4xf32>
      %27 = vector.shape_cast %24 : vector<8x4xf32> to vector<1x8x4xf32>
      tpu.vector_store %arg5[%c0_22, %c0_23, %c0_24], %27 {strides = array<i32>} : memref<1x8x4xf32, #tpu.memory_space<vmem>>, vector<1x8x4xf32>,
    } else {
    }
    return
  }
  func.func @transform_0(%arg0: i32, %arg1: i32) -> (i32, i32, i32) {
    %c0_i32 = arith.constant 0 : i32
    %c0_i32_0 = arith.constant 0 : i32
    return %arg0, %arg1, %c0_i32 : i32, i32, i32
  }
  func.func @transform_1(%arg0: i32, %arg1: i32) -> (i32, i32) {
    %c0_i32 = arith.constant 0 : i32
    %c0_i32_0 = arith.constant 0 : i32
    %c0_i32_1 = arith.constant 0 : i32
    return %c0_i32, %c0_i32_0 : i32, i32
  }
  func.func @transform_2(%arg0: i32, %arg1: i32) -> (i32, i32, i32) {
    %c0_i32 = arith.constant 0 : i32
    %c0_i32_0 = arith.constant 0 : i32
    return %arg0, %arg1, %c0_i32 : i32, i32, i32
  }
  func.func @transform_3(%arg0: i32, %arg1: i32) -> (i32, i32, i32) {
    %c0_i32 = arith.constant 0 : i32
    %c0_i32_0 = arith.constant 0 : i32
    %c0_i32_1 = arith.constant 0 : i32
    return %arg0, %c0_i32, %c0_i32_0 : i32, i32, i32
  }
}

</mosaic_0001>

<llo_original>
// kernel: fourier_decoder.1
$region0: #{fourier_decoder.1}
  #allocation0 [shape = 'u32[]', space=smem, size = 0x4, offset = 0x4, fixed_abs, tag = 'smem constant byte address 0x4 - core index']
  #allocation1 [shape = 'u32[144,128]{1,0:T(1,128)}', space=vmem, size = 0x12000, scoped, tag = 'internal scratch']
  #allocation2 [shape = 'f32[8,4]{1,0:T(8,128)}', space=vmem, size = 0x1000, scoped, tag = 'scratch operand']
  %s0 = inlined_call_operand.vmem [shape: bf16[2,8,32], index: 0, kind: input, shape index: {}]
  %s1 = inlined_call_operand.hbm [shape: bf16[32,256], index: 1, kind: input, shape index: {}]
  %s2 = inlined_call_operand.vmem [shape: f32[2,8,4], index: 2, kind: output, shape index: {0}]
  %s3 = inlined_call_operand.vmem [shape: f32[2,8,4], index: 3, kind: output, shape index: {1}]
  %4 = xla_tuple %s2, %s3
  %s5 = sld [smem:[#allocation0]]
  $region57: #{fourier_decoder.1} parent=0
    _
  %s7 = ssub.s32 1, %s5
  %s8 = scalar_select 0, %s7, %s5
  $region1: #{fourier_decoder.1} parent=0
    #allocation3 [shape = 'u8[16384]{0}', space=vmem, size = 0x4000, scoped, tag = 'input window, operand 1, single buffered']
    #allocation4 [shape = 's32[2]{0}', space=sflag, size = 0x8, scoped, tag = 'scoped memory for fourier_decoder.1']
    %9 = vsyncpa [#allocation4], 0
    loop: start=0, step=1, limit=4
    $region2: #{fourier_decoder.1} parent=1 // loop_pre_header
      _
    $region3: #{fourier_decoder.1} parent=1 // loop_header
      %s11 = sphi 0, %s15
      %p12 = scmp.ge.s32.totalorder %s11, 4
      %s18 = sphi 0, %s30
      %s19 = sphi 0, %s26
      %s20 = sphi 0, %s18
      %s21 = sphi 0, %s19
      %s22 = sphi 0, %s20
      %s23 = sphi 0, %s21
      %s35 = sphi 0, %s37
      %s38 = sphi 0, %s35
      %s39 = sphi 0, %s38
      %s55 = sphi 0, %s39
      %s59 = sphi 0, %s59
      %s61 = sphi 0, %s59
      %s62 = sphi 0, %s61
      %s76 = sphi 0, %s62
      %s84 = sphi 0, %s86
      %s87 = sphi 0, %s84
      %s88 = sphi 0, %s87
      %s104 = sphi 0, %s88
      %s110 = sphi 0, %s112
      %s113 = sphi 0, %s110
      %s114 = sphi 0, %s113
      %s130 = sphi 0, %s114
    $region4: #{fourier_decoder.1} parent=1 // loop_header_branch
      %14 = sbr.rel (%p12) target = $region8
    $region5: #{fourier_decoder.1} parent=1 // loop_body
      %s16 = ssub.s32 %s11, 1
      %s17 = ssub.s32 %s11, 2
      %s24 = sadd.s32 1, %s19
      %p25 = scmp.ge.s32.totalorder %s24, 1
      %s26 = scalar_select %p25, 0, %s24
      %s27 = sadd.s32 1, %s18
      %s28 = scalar_select %p25, %s27, %s18
      %p29 = scmp.ge.s32.totalorder %s28, 2
      %s30 = scalar_select %p29, 0, %s28
      %s31 = ssub.s32 %s18, %s30
      %s32 = ssub.s32 %s19, %s26
      %s33 = sor.u32 %s31, %s32
      %p34 = scmp.eq.s32.totalorder %s33, 0
      %s36 = sadd.s32 %s35, 1
      %s37 = scalar_select %p34, %s35, %s36
      %p40 = pneg %p34
      %p41 = scmp.eq.s32.totalorder %s11, 1
      %p42 = por %p40, %p41
      %p43 = scmp.ne.s32.totalorder %s35, %s38
      %p44 = scmp.eq.s32.totalorder %s11, 0
      %p45 = por %p43, %p44
      %p46 = scmp.ne.s32.totalorder %s35, %s38
      %p47 = scmp.eq.s32.totalorder %s16, 1
      %p48 = por %p46, %p47
      %p49 = scmp.ne.s32.totalorder %s38, %s39
      %p50 = scmp.eq.s32.totalorder %s16, 0
      %p51 = por %p49, %p50
      %p52 = scmp.ne.s32.totalorder %s38, %s39
      %p53 = scmp.eq.s32.totalorder %s17, 1
      %p54 = por %p52, %p53
      %p56 = scmp.ne.s32.totalorder %s39, %s55
      %p57 = scmp.eq.s32.totalorder %s17, 0
      %p58 = por %p56, %p57
      %s60 = sadd.s32 %s59, 1
      %p63 = scmp.eq.s32.totalorder %s11, 1
      %p64 = scmp.ne.s32.totalorder %s59, %s61
      %p65 = scmp.eq.s32.totalorder %s11, 0
      %p66 = por %p64, %p65
      %p67 = scmp.ne.s32.totalorder %s59, %s61
      %p68 = scmp.eq.s32.totalorder %s16, 1
      %p69 = por %p67, %p68
      %p70 = scmp.ne.s32.totalorder %s61, %s62
      %p71 = scmp.eq.s32.totalorder %s16, 0
      %p72 = por %p70, %p71
      %p73 = scmp.ne.s32.totalorder %s61, %s62
      %p74 = scmp.eq.s32.totalorder %s17, 1
      %p75 = por %p73, %p74
      %p77 = scmp.ne.s32.totalorder %s62, %s76
      %p78 = scmp.eq.s32.totalorder %s17, 0
      %p79 = por %p77, %p78
      %s80 = ssub.s32 %s18, %s30
      %s81 = ssub.s32 %s19, %s26
      %s82 = sor.u32 %s80, %s81
      %p83 = scmp.eq.s32.totalorder %s82, 0
      %s85 = sadd.s32 %s84, 1
      %s86 = scalar_select %p83, %s84, %s85
      %p89 = pneg %p83
      %p90 = scmp.eq.s32.totalorder %s11, 1
      %p91 = por %p89, %p90
      %p92 = scmp.ne.s32.totalorder %s84, %s87
      %p93 = scmp.eq.s32.totalorder %s11, 0
      %p94 = por %p92, %p93
      %p95 = scmp.ne.s32.totalorder %s84, %s87
      %p96 = scmp.eq.s32.totalorder %s16, 1
      %p97 = por %p95, %p96
      %p98 = scmp.ne.s32.totalorder %s87, %s88
      %p99 = scmp.eq.s32.totalorder %s16, 0
      %p100 = por %p98, %p99
      %p101 = scmp.ne.s32.totalorder %s87, %s88
      %p102 = scmp.eq.s32.totalorder %s17, 1
      %p103 = por %p101, %p102
      %p105 = scmp.ne.s32.totalorder %s88, %s104
      %p106 = scmp.eq.s32.totalorder %s17, 0
      %p107 = por %p105, %p106
      %s108 = ssub.s32 %s18, %s30
      %p109 = scmp.eq.s32.totalorder %s108, 0
      %s111 = sadd.s32 %s110, 1
      %s112 = scalar_select %p109, %s110, %s111
      %p115 = pneg %p109
      %p116 = scmp.eq.s32.totalorder %s11, 1
      %p117 = por %p115, %p116
      %p118 = scmp.ne.s32.totalorder %s110, %s113
      %p119 = scmp.eq.s32.totalorder %s11, 0
      %p120 = por %p118, %p119
      %p121 = scmp.ne.s32.totalorder %s110, %s113
      %p122 = scmp.eq.s32.totalorder %s16, 1
      %p123 = por %p121, %p122
      %p124 = scmp.ne.s32.totalorder %s113, %s114
      %p125 = scmp.eq.s32.totalorder %s16, 0
      %p126 = por %p124, %p125
      %p127 = scmp.ne.s32.totalorder %s113, %s114
      %p128 = scmp.eq.s32.totalorder %s17, 1
      %p129 = por %p127, %p128
      %p131 = scmp.ne.s32.totalorder %s114, %s130
      %p132 = scmp.eq.s32.totalorder %s17, 0
      %p133 = por %p131, %p132
      %p134 = scmp.le.s32.totalorder 1, %s11
      %p135 = scmp.lt.s32.totalorder %s11, 3
      %p136 = pnand %p134, %p135
      %p137 = pneg %p136
      // Predicated region
      $region9: #{fourier_decoder.1} parent=5 // pred_check
        _
      $region10: #{fourier_decoder.1} parent=5 // pred_check_branch
        %139 = sbr.rel (%p136) target = $region12
      $region11: #{fourier_decoder.1} parent=5 // pred_region
        %s140 = ssub.s32 %s11, 1
        // Predicated region
        $region13: #{fourier_decoder.1} parent=11 // pred_check
          %p141 = pneg %p72
        $region14: #{fourier_decoder.1} parent=11 // pred_check_branch
          %143 = sbr.rel (%p141) target = $region16
        $region15: #{fourier_decoder.1} parent=11 // pred_region
          %s145 = ssub.s32 512, 512
          %146 = vsyncadd [#allocation4], %s145
          %s147 = sshll.u32 [#allocation3], 4
          %s148 = int_to_ptr.vmem [resolvable:$true] %s147
          %153 = dma.hbm_to_vmem [thread:$0]  %s1, 512, %s148, [#allocation4], 128, 128, 8
        $region16: #{fourier_decoder.1} parent=11 // pred_fallthru
          _
      $region12: #{fourier_decoder.1} parent=5 // pred_fallthru
        _
      %p154 = scmp.lt.s32.totalorder %s11, 2
      // Predicated region
      $region17: #{fourier_decoder.1} parent=5 // pred_check
        %p155 = pneg %p154
      $region18: #{fourier_decoder.1} parent=5 // pred_check_branch
        %157 = sbr.rel (%p155) target = $region20
      $region19: #{fourier_decoder.1} parent=5 // pred_region
        // Predicated region
        $region21: #{fourier_decoder.1} parent=19 // pred_check
          %p158 = pneg %p45
        $region22: #{fourier_decoder.1} parent=19 // pred_check_branch
          %160 = sbr.rel (%p158) target = $region24
        $region23: #{fourier_decoder.1} parent=19 // pred_region
          %p161 = scmp.lt.s32.totalorder %s18, 1
          %s162 = scalar_select %p161, %s18, 1
          %p163 = scmp.lt.s32.totalorder %s19, 0
          %s164 = scalar_select %p163, %s19, 0
          %s165 = sadd.s32 %s164, %s162
          %s166 = smul.addr %s165, 4
          %s167 = scalar_lea.vmem %s0, %s166
        $region24: #{fourier_decoder.1} parent=19 // pred_fallthru
          _
      $region20: #{fourier_decoder.1} parent=5 // pred_fallthru
        _
      %p168 = scmp.le.s32.totalorder 1, %s11
      %p169 = scmp.lt.s32.totalorder %s11, 3
      %p170 = pnand %p168, %p169
      %p171 = pneg %p170
      // Predicated region
      $region25: #{fourier_decoder.1} parent=5 // pred_check
        _
      $region26: #{fourier_decoder.1} parent=5 // pred_check_branch
        %173 = sbr.rel (%p170) target = $region28
      $region27: #{fourier_decoder.1} parent=5 // pred_region
        %s174 = ssub.s32 %s11, 1
        // Predicated region
        $region29: #{fourier_decoder.1} parent=27 // pred_check
          %p175 = pneg %p72
        $region30: #{fourier_decoder.1} parent=27 // pred_check_branch
          %177 = sbr.rel (%p175) target = $region32
        $region31: #{fourier_decoder.1} parent=27 // pred_region
          %178 = dma.done [#allocation4], 512
        $region32: #{fourier_decoder.1} parent=27 // pred_fallthru
          _
        %p179 = scmp.lt.s32.totalorder %s20, 1
        %s180 = scalar_select %p179, %s20, 1
        %p181 = scmp.lt.s32.totalorder %s21, 0
        %s182 = scalar_select %p181, %s21, 0
        %s183 = sadd.s32 %s182, %s180
        %s184 = smul.addr %s183, 4
        %s185 = scalar_lea.vmem %s0, %s184
        %p186 = pneg %p51
        %p187 = pneg %p48
        %p188 = pneg %p72
        %p189 = pneg %p69
        %p190 = pneg %p100
        %p191 = pneg %p97
        %p192 = scmp.lt.s32.totalorder %s20, 1
        %s193 = scalar_select %p192, %s20, 1
        %p194 = scmp.lt.s32.totalorder %s21, 0
        %s195 = scalar_select %p194, %s21, 0
        %s196 = sadd.s32 %s195, %s193
        %s197 = smul.addr %s196, 8
        %s198 = scalar_lea.vmem %s2, %s197
        %p199 = pneg %p126
        %p200 = pneg %p123
        %p201 = scmp.lt.s32.totalorder %s20, 1
        %s202 = scalar_select %p201, %s20, 1
        %s203 = smul.addr %s202, 8
        %s204 = scalar_lea.vmem %s3, %s203
        %p205 = scmp.lt.s32.totalorder %s20, 1
        %s206 = scalar_select %p205, %s20, 1
        %p207 = scmp.lt.s32.totalorder %s21, 0
        %s208 = scalar_select %p207, %s21, 0
        %s209 = sadd.s32 %s208, %s206
        %s210 = smul.addr %s209, 4
        %s211 = scalar_lea.vmem %s0, %s210
        %p212 = scmp.lt.s32.totalorder %s20, 1
        %s213 = scalar_select %p212, %s20, 1
        %p214 = scmp.lt.s32.totalorder %s21, 0
        %s215 = scalar_select %p214, %s21, 0
        %s216 = sadd.s32 %s215, %s213
        %s217 = smul.addr %s216, 8
        %s218 = scalar_lea.vmem %s2, %s217
        %p219 = scmp.lt.s32.totalorder %s20, 1
        %s220 = scalar_select %p219, %s20, 1
        %s221 = smul.addr %s220, 8
        %s222 = scalar_lea.vmem %s3, %s221
        %v224 = vld [vmem:[%s211] sm:$0xf]
        %v225 = vld [vmem:[#allocation3] sm:$0xff]
        %v226 = vld [vmem:[#allocation3 + $0x8] sm:$0xff]
        %v227 = vld [vmem:[#allocation3 + $0x10] sm:$0xff]
        %v228 = vld [vmem:[#allocation3 + $0x18] sm:$0xff]
        %v233 = vunpack.c.l.b16 %v225
        %v234 = vunpack.c.h.b16 %v225
        %v235 = vunpack.c.l.b16 %v226
        %v236 = vunpack.c.h.b16 %v226
        %v237 = vunpack.c.l.b16 %v227
        %v238 = vunpack.c.h.b16 %v227
        %v239 = vunpack.c.l.b16 %v228
        %v240 = vunpack.c.h.b16 %v228
        %v241 = vpack.c.b16 %v235, %v233
        %v242 = vpack.c.b16 %v236, %v234
        %v243 = vpack.c.b16 %v239, %v237
        %v244 = vpack.c.b16 %v240, %v238
        %vm249 = vcmask 261120
        %v251 = vsel %vm249, %v224, 0
        %253 = vmatprep.subr.bf16.mxu0 0
        %254 = vmatpush1.bf16.msra.mxu0 0
        %255 = vmatprep.subr.bf16.mxu0 0
        %256 = vmatpush1.bf16.msra.mxu0 0
        %257 = vmatprep.subr.bf16.mxu0 0
        %258 = vmatpush1.bf16.msra.mxu0 0
        %259 = vmatprep.subr.bf16.mxu0 0
        %260 = vmatpush1.bf16.msra.mxu0 0
        %261 = vmatprep.subr.bf16.mxu0 0
        %262 = vmatpush1.bf16.msra.mxu0 0
        %263 = vmatprep.subr.bf16.mxu0 0
        %264 = vmatpush1.bf16.msra.mxu0 0
        %265 = vmatprep.subr.bf16.mxu0 %v244
        %266 = vmatpush1.bf16.msra.mxu0 %v243
        %267 = vmatprep.subr.bf16.mxu0 %v242
        %268 = vmatpush1.bf16.msra.mxu0 %v241
        %269 = vmatprep.subr.bf16.mxu0 0
        %270 = vmatpush2.bf16.msra.mxu0 0
        %271 = vmatprep.subr.bf16.mxu0 0
        %272 = vmatpush2.bf16.msra.mxu0 0
        %273 = vmatprep.subr.bf16.mxu0 0
        %274 = vmatpush2.bf16.msra.mxu0 0
        %275 = vmatprep.subr.bf16.mxu0 0
        %276 = vmatpush2.bf16.msra.mxu0 0
        %277 = vmatprep.subr.bf16.mxu0 0
        %278 = vmatpush2.bf16.msra.mxu0 0
        %279 = vmatprep.subr.bf16.mxu0 0
        %280 = vmatpush2.bf16.msra.mxu0 0
        %281 = vmatprep.subr.bf16.mxu0 0
        %282 = vmatpush2.bf16.msra.mxu0 0
        %283 = vmatprep.subr.bf16.mxu0 0
        %284 = vmatpush2.bf16.msra.mxu0 0
        %285 = vmatprep.mubr.bf16.mxu0 0
        %286 = vmatmul.mubr.bf16.gmra.mxu0 %v251
        %v287 = vpop.f32.mrf.mxu0
        %v288 = vadd.f32 0.0, %v287
        %v289 = vpop.f32.mrf.mxu0
        %v290 = vadd.f32 0.0, %v289
        %v291 = vpop.f32.mrf.mxu0
        %v292 = vpop.f32.mrf.mxu0
        %293 = vdwg.mxu0
        %vm294 = vcmask 31744
        %295 = vst.msk [vmem:[%s218] sm:$0xff] %vm294, %v288
        %v296 = vld [vmem:[%s218 + $0x1] sm:$0x7f]
        %v297 = vadd.f32 %v296, %v290
        %vm298 = vcmask 30720
        %299 = vst.msk [vmem:[%s218 + $0x1] sm:$0x7f] %vm298, %v297
        %300 = vst.msk [vmem:[#allocation2] sm:$0xff] %vm294, 0.0
        %v301 = vld [vmem:[#allocation2] sm:$0x1]
        %v303 = vrot.slane %v290, 7
        %v305 = vadd.f32 %v301, %v303
        %vm306 = vcmask 24576
        %307 = vst.msk [vmem:[#allocation2] sm:$0x1] %vm306, %v305
        %p308 = scmp.eq.s32.totalorder %s21, 0
        // Predicated region
        $region33: #{fourier_decoder.1} parent=27 // pred_check
          %p309 = pneg %p308
        $region34: #{fourier_decoder.1} parent=27 // pred_check_branch
          %311 = sbr.rel (%p309) target = $region36
        $region35: #{fourier_decoder.1} parent=27 // pred_region
          %v312 = vld [vmem:[#allocation2] sm:$0xff]
          %313 = vst.msk [vmem:[%s222] sm:$0xff] %vm294, %v312
        $region36: #{fourier_decoder.1} parent=27 // pred_fallthru
          _
        %p314 = scmp.lt.s32.totalorder %s20, 1
        %s315 = scalar_select %p314, %s20, 1
        %p316 = scmp.lt.s32.totalorder %s21, 0
        %s317 = scalar_select %p316, %s21, 0
        %s318 = sadd.s32 %s317, %s315
        %s319 = smul.addr %s318, 8
        %s320 = scalar_lea.vmem %s2, %s319
        %p321 = scmp.lt.s32.totalorder %s20, 1
        %s322 = scalar_select %p321, %s20, 1
        %s323 = smul.addr %s322, 8
        %s324 = scalar_lea.vmem %s3, %s323
        // Predicated region
        $region37: #{fourier_decoder.1} parent=27 // pred_check
          %p325 = pneg %p97
        $region38: #{fourier_decoder.1} parent=27 // pred_check_branch
          %327 = sbr.rel (%p325) target = $region40
        $region39: #{fourier_decoder.1} parent=27 // pred_region
          _
        $region40: #{fourier_decoder.1} parent=27 // pred_fallthru
          _
        // Predicated region
        $region41: #{fourier_decoder.1} parent=27 // pred_check
          %p328 = pneg %p123
        $region42: #{fourier_decoder.1} parent=27 // pred_check_branch
          %330 = sbr.rel (%p328) target = $region44
        $region43: #{fourier_decoder.1} parent=27 // pred_region
          _
        $region44: #{fourier_decoder.1} parent=27 // pred_fallthru
          _
      $region28: #{fourier_decoder.1} parent=5 // pred_fallthru
        _
      %p331 = scmp.le.s32.totalorder 2, %s11
      // Predicated region
      $region45: #{fourier_decoder.1} parent=5 // pred_check
        %p332 = pneg %p331
      $region46: #{fourier_decoder.1} parent=5 // pred_check_branch
        %334 = sbr.rel (%p332) target = $region48
      $region47: #{fourier_decoder.1} parent=5 // pred_region
        %s335 = ssub.s32 %s11, 2
        // Predicated region
        $region49: #{fourier_decoder.1} parent=47 // pred_check
          %p336 = pneg %p103
        $region50: #{fourier_decoder.1} parent=47 // pred_check_branch
          %338 = sbr.rel (%p336) target = $region52
        $region51: #{fourier_decoder.1} parent=47 // pred_region
          %p339 = scmp.lt.s32.totalorder %s22, 1
          %s340 = scalar_select %p339, %s22, 1
          %p341 = scmp.lt.s32.totalorder %s23, 0
          %s342 = scalar_select %p341, %s23, 0
          %s343 = sadd.s32 %s342, %s340
          %s344 = smul.addr %s343, 8
          %s345 = scalar_lea.vmem %s2, %s344
        $region52: #{fourier_decoder.1} parent=47 // pred_fallthru
          _
        // Predicated region
        $region53: #{fourier_decoder.1} parent=47 // pred_check
          %p346 = pneg %p129
        $region54: #{fourier_decoder.1} parent=47 // pred_check_branch
          %348 = sbr.rel (%p346) target = $region56
        $region55: #{fourier_decoder.1} parent=47 // pred_region
          %p349 = scmp.lt.s32.totalorder %s22, 1
          %s350 = scalar_select %p349, %s22, 1
          %s351 = smul.addr %s350, 8
          %s352 = scalar_lea.vmem %s3, %s351
        $region56: #{fourier_decoder.1} parent=47 // pred_fallthru
          _
      $region48: #{fourier_decoder.1} parent=5 // pred_fallthru
        _
    $region6: #{fourier_decoder.1} parent=1 // loop_footer
      %s15 = sadd.s32 1, %s11
    $region7: #{fourier_decoder.1} parent=1 // loop_footer_branch
      %10 = sbr.rel target = $region3
    $region8: #{fourier_decoder.1} parent=1 // loop_exit
      _
    %353 = vsyncpa [#allocation4], 1
    %s354 = scalar_lea.sflag [#allocation4], 1
    %355 = vsyncpa %s354, 1

</llo_original>
